<compile_context>
chip_gen: v7x
topology: tpu7x:2x2x1
jax: 0.10.0
libtpu: 0.0.40
codegen_flags: <defaults>
</compile_context>

<pallas_src>
import math
import functools

import jax
import jax.numpy as jnp
import numpy as np
from jax import lax
from jax.experimental import pallas as pl
from jax.experimental.pallas import tpu as pltpu


# ----------------------------- config (small, synthetic) -----------------------------
BATCH = 2
SEQ = 8
HIDDEN = 256
NUM_HEADS = 2
NUM_KV_HEADS = 1                          # GQA: n_rep = 2
HEAD_DIM = HIDDEN // NUM_HEADS            # 128 -> every per-head tile is lane-dense
N_REP = NUM_HEADS // NUM_KV_HEADS
ROPE_THETA = 10000.0
QKV_WIDTH = (NUM_HEADS + 2 * NUM_KV_HEADS) * HEAD_DIM   # 512
NEG_INF = -1e30                           # scores stay f32, so this is safe


# ----------------------------- fused attention kernel --------------------------------
def _fused_attn_kernel(x_ref, wqkv_ref, wo_ref, cos_ref, sin_ref, o_ref, *,
                       num_heads, num_kv_heads, head_dim):
    # x_ref    : (S, H)        f32   per-batch activation slab
    # wqkv_ref : (H, QKV_W)    bf16  pre-transposed fused QKV weight
    # wo_ref   : (H, H)        bf16  pre-transposed o_proj weight
    # cos/sin  : (S, D)        f32
    # o_ref    : (S, H)        f32   lane-dense output slab
    n_rep = num_heads // num_kv_heads
    half = head_dim // 2
    scale = 1.0 / math.sqrt(head_dim)
    s = x_ref.shape[0]
    q_w = num_heads * head_dim
    kv_w = num_kv_heads * head_dim

    # ---- fused QKV projection: bf16 MXU operands, f32 accumulation -------------------
    x_bf = x_ref[...].astype(jnp.bfloat16)
    qkv = jnp.dot(x_bf, wqkv_ref[...], preferred_element_type=jnp.float32)  # (S, QKV_W)

    cos = cos_ref[...]
    sin = sin_ref[...]

    def rope(v):  # f32 elementwise; exact rotate_half = cat(-x2, x1)
        rot = jnp.concatenate([-v[:, half:], v[:, :half]], axis=1)
        return v * cos + rot * sin

    # Causal mask for the n_rep query heads stacked along rows: query pos of row i is i%S.
    rows = n_rep * s
    row_pos = lax.broadcasted_iota(jnp.int32, (rows, s), 0) % s
    col_pos = lax.broadcasted_iota(jnp.int32, (rows, s), 1)
    causal = row_pos >= col_pos

    head_out = [None] * num_heads
    for g in range(num_kv_heads):
        # RoPE K once per KV head; V untouched.
        k_g = rope(qkv[:, q_w + g * head_dim: q_w + (g + 1) * head_dim])          # (S, D)
        v_g = qkv[:, q_w + kv_w + g * head_dim: q_w + kv_w + (g + 1) * head_dim]  # (S, D)

        # Stack this group's query heads into one MXU LHS: (n_rep*S, D).
        q_stack = jnp.concatenate(
            [rope(qkv[:, (g * n_rep + r) * head_dim:(g * n_rep + r + 1) * head_dim]) * scale
             for r in range(n_rep)], axis=0)

        # Q @ K^T : contract the last dims (no in-kernel transpose of K).
        scores = lax.dot_general(
            q_stack.astype(jnp.bfloat16), k_g.astype(jnp.bfloat16),
            dimension_numbers=(((1,), (1,)), ((), ())),
            preferred_element_type=jnp.float32)                                   # (n_rep*S, S)

        scores = jnp.where(causal, scores, NEG_INF)                               # f32 mask
        m = jnp.max(scores, axis=-1, keepdims=True)
        p = jnp.exp(scores - m)
        p = p / jnp.sum(p, axis=-1, keepdims=True)                                # f32 softmax

        o_stack = jnp.dot(p.astype(jnp.bfloat16), v_g.astype(jnp.bfloat16),
                          preferred_element_type=jnp.float32)                     # (n_rep*S, D)
        for r in range(n_rep):
            head_out[g * n_rep + r] = o_stack[r * s:(r + 1) * s, :]

    attn_out = jnp.concatenate(head_out, axis=1)                                  # (S, NH*D)

    # ---- output projection, lane-dense (S, H) store ----------------------------------
    o_ref[...] = jnp.dot(attn_out.astype(jnp.bfloat16), wo_ref[...],
                         preferred_element_type=jnp.float32)


def llama_attention_forward(hidden_states, params):
    B, S, H = hidden_states.shape
    wqkv_t = params["w_qkv_t"]          # (H, QKV_WIDTH) bf16
    wo_t = params["wo_t"]               # (H, H) bf16
    cos, sin = params["cos"], params["sin"]

    kernel = functools.partial(_fused_attn_kernel,
                               num_heads=NUM_HEADS,
                               num_kv_heads=NUM_KV_HEADS,
                               head_dim=HEAD_DIM)

    flops = (2 * B * S * H * QKV_WIDTH            # qkv projection
             + 4 * B * NUM_HEADS * S * S * HEAD_DIM   # QK^T + PV
             + 2 * B * S * H * H)                 # o projection
    bytes_accessed = (4 * B * S * H               # x read (f32)
                      + 2 * (H * QKV_WIDTH + H * H)   # bf16 weights
                      + 2 * 4 * S * HEAD_DIM      # cos/sin
                      + 4 * B * S * H)            # output write

    return pl.pallas_call(
        kernel,
        out_shape=jax.ShapeDtypeStruct((B, S, H), jnp.float32),
        grid=(B,),
        in_specs=[
            pl.BlockSpec((None, S, H), lambda b: (b, 0, 0)),
            pl.BlockSpec((H, QKV_WIDTH), lambda b: (0, 0)),
            pl.BlockSpec((H, H), lambda b: (0, 0)),
            pl.BlockSpec((S, HEAD_DIM), lambda b: (0, 0)),
            pl.BlockSpec((S, HEAD_DIM), lambda b: (0, 0)),
        ],
        out_specs=pl.BlockSpec((None, S, H), lambda b: (b, 0, 0)),
        compiler_params=pltpu.CompilerParams(
            dimension_semantics=("parallel",),
            vmem_limit_bytes=32 * 1024 * 1024),
        cost_estimate=pl.CostEstimate(
            flops=flops,
            transcendentals=B * NUM_HEADS * S * S,
            bytes_accessed=bytes_accessed),
    )(hidden_states, wqkv_t, wo_t, cos, sin)


# ----------------------------- rotary tables (built once, outside hot path) -----------
def rotary_tables(seq_len, head_dim, theta):
    inv_freq = 1.0 / (theta ** (jnp.arange(0, head_dim, 2, dtype=jnp.float32) / head_dim))
    pos = jnp.arange(seq_len, dtype=jnp.float32)
    freqs = jnp.outer(pos, inv_freq)                   # (S, D/2)
    emb = jnp.concatenate([freqs, freqs], axis=-1)     # (S, D)
    return jnp.cos(emb), jnp.sin(emb)


# ----------------------------- pure-JAX f32 reference (sanity check) -------------------
def reference_forward(hidden_states, params):
    B, S, H = hidden_states.shape
    q = hidden_states @ params["wq"].T
    k = hidden_states @ params["wk"].T
    v = hidden_states @ params["wv"].T
    q = q.reshape(B, S, NUM_HEADS, HEAD_DIM).transpose(0, 2, 1, 3)
    k = k.reshape(B, S, NUM_KV_HEADS, HEAD_DIM).transpose(0, 2, 1, 3)
    v = v.reshape(B, S, NUM_KV_HEADS, HEAD_DIM).transpose(0, 2, 1, 3)

    cos_b, sin_b = params["cos"][None, None], params["sin"][None, None]

    def rot_half(x):
        h = x.shape[-1] // 2
        return jnp.concatenate([-x[..., h:], x[..., :h]], axis=-1)

    q = q * cos_b + rot_half(q) * sin_b
    k = k * cos_b + rot_half(k) * sin_b

    k = jnp.repeat(k, N_REP, axis=1)
    v = jnp.repeat(v, N_REP, axis=1)

    scores = jnp.einsum("bhqd,bhkd->bhqk", q, k) / math.sqrt(HEAD_DIM)
    mask = jnp.tril(jnp.ones((S, S), dtype=bool))
    scores = jnp.where(mask[None, None], scores, NEG_INF)
    p = jax.nn.softmax(scores.astype(jnp.float32), axis=-1)
    o = jnp.einsum("bhqk,bhkd->bhqd", p, v)
    o = o.transpose(0, 2, 1, 3).reshape(B, S, H)
    return o @ params["wo"].T


# ----------------------------- main ----------------------------------------------------
if __name__ == "__main__":
    key = jax.random.PRNGKey(0)
    k_x, k_q, k_k, k_v, k_o = jax.random.split(key, 5)

    x = jax.random.normal(k_x, (BATCH, SEQ, HIDDEN), dtype=jnp.float32)

    def init_w(k, out_f, in_f):
        # nn.Linear weight layout: (out_features, in_features), attention_bias=False
        scale = 1.0 / math.sqrt(in_f)
        return jax.random.uniform(k, (out_f, in_f), jnp.float32, -scale, scale)

    wq = init_w(k_q, NUM_HEADS * HEAD_DIM, HIDDEN)
    wk = init_w(k_k, NUM_KV_HEADS * HEAD_DIM, HIDDEN)
    wv = init_w(k_v, NUM_KV_HEADS * HEAD_DIM, HIDDEN)
    wo = init_w(k_o, HIDDEN, HIDDEN)

    cos, sin = rotary_tables(SEQ, HEAD_DIM, ROPE_THETA)   # computed once, reused per call

    params = {
        "wq": wq, "wk": wk, "wv": wv, "wo": wo,
        # fused QKV weight, pre-transposed once on the host to (K, N) and cast to bf16
        "w_qkv_t": jnp.concatenate([wq, wk, wv], axis=0).T.astype(jnp.bfloat16),
        "wo_t": wo.T.astype(jnp.bfloat16),
        "cos": cos, "sin": sin,
    }

    out = jax.block_until_ready(llama_attention_forward(x, params))
    ref = jax.block_until_ready(reference_forward(x, params))

    # Tolerance covers bf16 MXU operands (f32 accumulation) vs the pure-f32 reference.
    np.testing.assert_allclose(np.asarray(out), np.asarray(ref), rtol=2e-2, atol=2e-2)

    print("KERNEL_OK")
</pallas_src>

<mosaic_0001>
module attributes {stable_mosaic.version = 11 : i64} {
  func.func @_fused_attn_kernel(%arg0: i32, %arg1: memref<1x8x256xf32, #tpu.memory_space<vmem>>, %arg2: memref<256x512xbf16, #tpu.memory_space<vmem>>, %arg3: memref<256x256xbf16, #tpu.memory_space<vmem>>, %arg4: memref<8x128xf32, #tpu.memory_space<vmem>>, %arg5: memref<8x128xf32, #tpu.memory_space<vmem>>, %arg6: memref<1x8x256xf32, #tpu.memory_space<vmem>>) attributes {dimension_semantics = [#tpu.dimension_semantics<parallel>], iteration_bounds = array<i64: 2>, scalar_prefetch = 0 : i64, scratch_operands = 0 : i64, tpu.core_type = #tpu.core_type<tc>, window_params = [{transform_indices = @transform_0, window_bounds = array<i64: 1, 8, 256>}, {pipeline_mode = #tpu.pipeline_mode<synchronous>, transform_indices = @transform_1, window_bounds = array<i64: 256, 512>}, {pipeline_mode = #tpu.pipeline_mode<synchronous>, transform_indices = @transform_2, window_bounds = array<i64: 256, 256>}, {pipeline_mode = #tpu.pipeline_mode<synchronous>, transform_indices = @transform_3, window_bounds = array<i64: 8, 128>}, {pipeline_mode = #tpu.pipeline_mode<synchronous>, transform_indices = @transform_4, window_bounds = array<i64: 8, 128>}, {transform_indices = @transform_5, window_bounds = array<i64: 1, 8, 256>}]} {
    %c0 = arith.constant 0 : index
    %c0_0 = arith.constant 0 : index
    %c0_1 = arith.constant 0 : index
    %0 = vector.load %arg1[%c0, %c0_0, %c0_1] : memref<1x8x256xf32, #tpu.memory_space<vmem>>, vector<1x8x256xf32>
    %1 = vector.shape_cast %0 : vector<1x8x256xf32> to vector<8x256xf32>
    %2 = arith.truncf %1 : vector<8x256xf32> to vector<8x256xbf16>
    %c0_2 = arith.constant 0 : index
    %c0_3 = arith.constant 0 : index
    %3 = vector.load %arg2[%c0_2, %c0_3] : memref<256x512xbf16, #tpu.memory_space<vmem>>, vector<256x512xbf16>
    %cst = arith.constant dense<0.000000e+00> : vector<8x512xf32>
    %4 = tpu.matmul %2, %3, %cst {dimension_numbers = #tpu.dot_dimension_numbers<[1], [0], [0], [1], [0, 0, 1, 1], [], []>} : vector<8x256xbf16>, vector<256x512xbf16>, vector<8x512xf32> -> vector<8x512xf32>
    %c0_4 = arith.constant 0 : index
    %c0_5 = arith.constant 0 : index
    %5 = vector.load %arg4[%c0_4, %c0_5] : memref<8x128xf32, #tpu.memory_space<vmem>>, vector<8x128xf32>
    %c0_6 = arith.constant 0 : index
    %c0_7 = arith.constant 0 : index
    %6 = vector.load %arg5[%c0_6, %c0_7] : memref<8x128xf32, #tpu.memory_space<vmem>>, vector<8x128xf32>
    %7 = tpu.iota {dimensions = array<i32: 0>} : vector<16x8xi32>
    %c8_i32 = arith.constant 8 : i32
    %c0_i32 = arith.constant 0 : i32
    %8 = arith.cmpi eq, %c8_i32, %c0_i32 : i32
    %c1_i32 = arith.constant 1 : i32
    %9 = arith.select %8, %c1_i32, %c8_i32 : i32
    %10 = vector.broadcast %9 : i32 to vector<16x8xi32>
    %11 = arith.remsi %7, %10 : vector<16x8xi32>
    %c0_i32_8 = arith.constant 0 : i32
    %12 = vector.broadcast %c0_i32_8 : i32 to vector<16x8xi32>
    %13 = arith.cmpi ne, %11, %12 : vector<16x8xi32>
    %c0_i32_9 = arith.constant 0 : i32
    %14 = vector.broadcast %c0_i32_9 : i32 to vector<16x8xi32>
    %15 = arith.cmpi slt, %11, %14 : vector<16x8xi32>
    %c0_i32_10 = arith.constant 0 : i32
    %16 = arith.cmpi slt, %9, %c0_i32_10 : i32
    %17 = vector.broadcast %16 : i1 to vector<16x8xi1>
    %18 = vector.broadcast %17 : vector<16x8xi1> to vector<16x8xi1>
    %19 = arith.xori %15, %18 : vector<16x8xi1>
    %20 = arith.andi %19, %13 : vector<16x8xi1>
    %21 = vector.broadcast %9 : i32 to vector<16x8xi32>
    %22 = arith.addi %11, %21 : vector<16x8xi32>
    %23 = arith.select %20, %22, %11 : vector<16x8xi1>, vector<16x8xi32>
    %24 = tpu.iota {dimensions = array<i32: 1>} : vector<16x8xi32>
    %25 = arith.cmpi sge, %23, %24 : vector<16x8xi32>
    %26 = vector.extract_strided_slice %4 {offsets = [0, 256], sizes = [8, 128], strides = [1, 1]} : vector<8x512xf32> to vector<8x128xf32>
    %27 = vector.extract_strided_slice %26 {offsets = [0, 64], sizes = [8, 64], strides = [1, 1]} : vector<8x128xf32> to vector<8x64xf32>
    %cst_11 = arith.constant 0.000000e+00 : f32
    %28 = vector.broadcast %cst_11 : f32 to vector<8x64xf32>
    %29 = arith.subf %28, %27 : vector<8x64xf32>
    %30 = vector.extract_strided_slice %26 {offsets = [0, 0], sizes = [8, 64], strides = [1, 1]} : vector<8x128xf32> to vector<8x64xf32>
    %31 = tpu.concatenate %29, %30 in 1 : vector<8x64xf32>, vector<8x64xf32> -> vector<8x128xf32>
    %32 = arith.mulf %26, %5 : vector<8x128xf32>
    %33 = arith.mulf %31, %6 : vector<8x128xf32>
    %34 = arith.addf %32, %33 : vector<8x128xf32>
    %35 = vector.extract_strided_slice %4 {offsets = [0, 384], sizes = [8, 128], strides = [1, 1]} : vector<8x512xf32> to vector<8x128xf32>
    %36 = vector.extract_strided_slice %4 {offsets = [0, 0], sizes = [8, 128], strides = [1, 1]} : vector<8x512xf32> to vector<8x128xf32>
    %37 = vector.extract_strided_slice %36 {offsets = [0, 64], sizes = [8, 64], strides = [1, 1]} : vector<8x128xf32> to vector<8x64xf32>
    %cst_12 = arith.constant 0.000000e+00 : f32
    %38 = vector.broadcast %cst_12 : f32 to vector<8x64xf32>
    %39 = arith.subf %38, %37 : vector<8x64xf32>
    %40 = vector.extract_strided_slice %36 {offsets = [0, 0], sizes = [8, 64], strides = [1, 1]} : vector<8x128xf32> to vector<8x64xf32>
    %41 = tpu.concatenate %39, %40 in 1 : vector<8x64xf32>, vector<8x64xf32> -> vector<8x128xf32>
    %42 = arith.mulf %36, %5 : vector<8x128xf32>
    %43 = arith.mulf %41, %6 : vector<8x128xf32>
    %44 = arith.addf %42, %43 : vector<8x128xf32>
    %cst_13 = arith.constant 0.0883883461 : f32
    %45 = vector.broadcast %cst_13 : f32 to vector<8x128xf32>
    %46 = arith.mulf %44, %45 : vector<8x128xf32>
    %47 = vector.extract_strided_slice %4 {offsets = [0, 128], sizes = [8, 128], strides = [1, 1]} : vector<8x512xf32> to vector<8x128xf32>
    %48 = vector.extract_strided_slice %47 {offsets = [0, 64], sizes = [8, 64], strides = [1, 1]} : vector<8x128xf32> to vector<8x64xf32>
    %cst_14 = arith.constant 0.000000e+00 : f32
    %49 = vector.broadcast %cst_14 : f32 to vector<8x64xf32>
    %50 = arith.subf %49, %48 : vector<8x64xf32>
    %51 = vector.extract_strided_slice %47 {offsets = [0, 0], sizes = [8, 64], strides = [1, 1]} : vector<8x128xf32> to vector<8x64xf32>
    %52 = tpu.concatenate %50, %51 in 1 : vector<8x64xf32>, vector<8x64xf32> -> vector<8x128xf32>
    %53 = arith.mulf %47, %5 : vector<8x128xf32>
    %54 = arith.mulf %52, %6 : vector<8x128xf32>
    %55 = arith.addf %53, %54 : vector<8x128xf32>
    %cst_15 = arith.constant 0.0883883461 : f32
    %56 = vector.broadcast %cst_15 : f32 to vector<8x128xf32>
    %57 = arith.mulf %55, %56 : vector<8x128xf32>
    %58 = tpu.concatenate %46, %57 in 0 : vector<8x128xf32>, vector<8x128xf32> -> vector<16x128xf32>
    %59 = arith.truncf %58 : vector<16x128xf32> to vector<16x128xbf16>
    %60 = arith.truncf %34 : vector<8x128xf32> to vector<8x128xbf16>
    %cst_16 = arith.constant dense<0.000000e+00> : vector<16x8xf32>
    %61 = tpu.matmul %59, %60, %cst_16 {dimension_numbers = #tpu.dot_dimension_numbers<[1], [1], [0], [0], [0, 0, 1, 0], [], []>} : vector<16x128xbf16>, vector<8x128xbf16>, vector<16x8xf32> -> vector<16x8xf32>
    %cst_17 = arith.constant -1.000000e+30 : f32
    %62 = vector.broadcast %cst_17 : f32 to vector<16x8xf32>
    %63 = arith.select %25, %61, %62 : vector<16x8xi1>, vector<16x8xf32>
    %cst_18 = arith.constant dense<0xFF800000> : vector<16xf32>
    %64 = vector.multi_reduction <maximumf>, %63, %cst_18 [1] : vector<16x8xf32> to vector<16xf32>
    %65 = vector.shape_cast %64 : vector<16xf32> to vector<16x1xf32>
    %66 = vector.broadcast %65 : vector<16x1xf32> to vector<16x8xf32>
    %67 = arith.subf %63, %66 : vector<16x8xf32>
    %68 = math.exp %67 : vector<16x8xf32>
    %cst_19 = arith.constant dense<0.000000e+00> : vector<16xf32>
    %69 = vector.multi_reduction <add>, %68, %cst_19 [1] : vector<16x8xf32> to vector<16xf32>
    %70 = vector.shape_cast %69 : vector<16xf32> to vector<16x1xf32>
    %71 = vector.broadcast %70 : vector<16x1xf32> to vector<16x8xf32>
    %72 = arith.divf %68, %71 : vector<16x8xf32>
    %73 = arith.truncf %72 : vector<16x8xf32> to vector<16x8xbf16>
    %74 = arith.truncf %35 : vector<8x128xf32> to vector<8x128xbf16>
    %cst_20 = arith.constant dense<0.000000e+00> : vector<16x128xf32>
    %75 = tpu.matmul %73, %74, %cst_20 {dimension_numbers = #tpu.dot_dimension_numbers<[1], [0], [0], [1], [0, 0, 1, 1], [], []>} : vector<16x8xbf16>, vector<8x128xbf16>, vector<16x128xf32> -> vector<16x128xf32>
    %76 = vector.extract_strided_slice %75 {offsets = [0, 0], sizes = [8, 128], strides = [1, 1]} : vector<16x128xf32> to vector<8x128xf32>
    %77 = vector.extract_strided_slice %75 {offsets = [8, 0], sizes = [8, 128], strides = [1, 1]} : vector<16x128xf32> to vector<8x128xf32>
    %78 = tpu.concatenate %76, %77 in 1 : vector<8x128xf32>, vector<8x128xf32> -> vector<8x256xf32>
    %79 = arith.truncf %78 : vector<8x256xf32> to vector<8x256xbf16>
    %c0_21 = arith.constant 0 : index
    %c0_22 = arith.constant 0 : index
    %80 = vector.load %arg3[%c0_21, %c0_22] : memref<256x256xbf16, #tpu.memory_space<vmem>>, vector<256x256xbf16>
    %cst_23 = arith.constant dense<0.000000e+00> : vector<8x256xf32>
    %81 = tpu.matmul %79, %80, %cst_23 {dimension_numbers = #tpu.dot_dimension_numbers<[1], [0], [0], [1], [0, 0, 1, 1], [], []>} : vector<8x256xbf16>, vector<256x256xbf16>, vector<8x256xf32> -> vector<8x256xf32>
    %c0_24 = arith.constant 0 : index
    %c0_25 = arith.constant 0 : index
    %c0_26 = arith.constant 0 : index
    %82 = vector.load %arg6[%c0_24, %c0_25, %c0_26] : memref<1x8x256xf32, #tpu.memory_space<vmem>>, vector<1x8x256xf32>
    %83 = vector.shape_cast %82 : vector<1x8x256xf32> to vector<8x256xf32>
    %84 = vector.shape_cast %81 : vector<8x256xf32> to vector<1x8x256xf32>
    tpu.vector_store %arg6[%c0_24, %c0_25, %c0_26], %84 {strides = array<i32>} : memref<1x8x256xf32, #tpu.memory_space<vmem>>, vector<1x8x256xf32>,
    return
  }
  func.func @transform_0(%arg0: i32) -> (i32, i32, i32) {
    %c0_i32 = arith.constant 0 : i32
    %c0_i32_0 = arith.constant 0 : i32
    %c0_i32_1 = arith.constant 0 : i32
    return %arg0, %c0_i32, %c0_i32_0 : i32, i32, i32
  }
  func.func @transform_1(%arg0: i32) -> (i32, i32) {
    %c0_i32 = arith.constant 0 : i32
    %c0_i32_0 = arith.constant 0 : i32
    %c0_i32_1 = arith.constant 0 : i32
    return %c0_i32, %c0_i32_0 : i32, i32
  }
  func.func @transform_2(%arg0: i32) -> (i32, i32) {
    %c0_i32 = arith.constant 0 : i32
    %c0_i32_0 = arith.constant 0 : i32
    %c0_i32_1 = arith.constant 0 : i32
    return %c0_i32, %c0_i32_0 : i32, i32
  }
  func.func @transform_3(%arg0: i32) -> (i32, i32) {
    %c0_i32 = arith.constant 0 : i32
    %c0_i32_0 = arith.constant 0 : i32
    %c0_i32_1 = arith.constant 0 : i32
    return %c0_i32, %c0_i32_0 : i32, i32
  }
  func.func @transform_4(%arg0: i32) -> (i32, i32) {
    %c0_i32 = arith.constant 0 : i32
    %c0_i32_0 = arith.constant 0 : i32
    %c0_i32_1 = arith.constant 0 : i32
    return %c0_i32, %c0_i32_0 : i32, i32
  }
  func.func @transform_5(%arg0: i32) -> (i32, i32, i32) {
    %c0_i32 = arith.constant 0 : i32
    %c0_i32_0 = arith.constant 0 : i32
    %c0_i32_1 = arith.constant 0 : i32
    return %arg0, %c0_i32, %c0_i32_0 : i32, i32, i32
  }
}

</mosaic_0001>

<llo_original>
// kernel: tpu_custom_call.1
$region0: #{tpu_custom_call.1}
  #allocation0 [shape = 'u32[]', space=smem, size = 0x4, offset = 0x4, fixed_abs, tag = 'smem constant byte address 0x4 - core index']
  #allocation1 [shape = 'u32[144,128]{1,0:T(1,128)}', space=vmem, size = 0x12000, scoped, tag = 'internal scratch']
  %s0 = inlined_call_operand.hbm [shape: f32[2,8,256], index: 0, kind: input, shape index: {}]
  %s1 = inlined_call_operand.hbm [shape: bf16[256,512], index: 1, kind: input, shape index: {}]
  %s2 = inlined_call_operand.hbm [shape: bf16[256,256], index: 2, kind: input, shape index: {}]
  %s3 = inlined_call_operand.vmem [shape: f32[8,128], index: 3, kind: input, shape index: {}]
  %s4 = inlined_call_operand.hbm [shape: f32[8,128], index: 4, kind: input, shape index: {}]
  %s5 = inlined_call_operand.hbm [shape: f32[2,8,256], index: 5, kind: output, shape index: {}]
  %s6 = sld [smem:[#allocation0]]
  $region69: #{tpu_custom_call.1} parent=0
    _
  %s8 = ssub.s32 1, %s6
  %s9 = scalar_select 0, %s8, %s6
  $region1: #{tpu_custom_call.1} parent=0
    #allocation2 [shape = 'u8[16384]{0}', space=vmem, size = 0x4000, scoped, tag = 'input window, operand 0']
    #allocation3 [shape = 's32[2]{0}', space=sflag, size = 0x8, scoped, tag = 'scoped memory for tpu_custom_call.1']
    #allocation4 [shape = 's32[2]{0}', space=sflag, size = 0x8, scoped, tag = 'scoped memory for tpu_custom_call.1']
    #allocation5 [shape = 'u8[262144]{0}', space=vmem, size = 0x40000, scoped, tag = 'input window, operand 1, single buffered']
    #allocation6 [shape = 's32[1]{0}', space=sflag, size = 0x4, scoped, tag = 'scoped memory for tpu_custom_call.1']
    #allocation7 [shape = 'u8[131072]{0}', space=vmem, size = 0x20000, scoped, tag = 'input window, operand 2, single buffered']
    #allocation8 [shape = 'u8[4096]{0}', space=vmem, size = 0x1000, scoped, tag = 'input window, operand 4, single buffered']
    #allocation9 [shape = 's32[1]{0}', space=sflag, size = 0x4, scoped, tag = 'scoped memory for tpu_custom_call.1']
    #allocation10 [shape = 'u8[16384]{0}', space=vmem, size = 0x4000, scoped, tag = 'output window, operand 0']
    %10 = vsyncpa [#allocation3], 0
    %s11 = scalar_lea.sflag [#allocation3], 1
    %12 = vsyncpa %s11, 0
    %13 = vsyncpa [#allocation6], 0
    %14 = vsyncpa [#allocation9], 0
    %15 = vsyncpa [#allocation4], 0
    %s16 = scalar_lea.sflag [#allocation4], 1
    %17 = vsyncpa %s16, 0
    loop: start=0, step=1, limit=4
    $region2: #{tpu_custom_call.1} parent=1 // loop_pre_header
      _
    $region3: #{tpu_custom_call.1} parent=1 // loop_header
      %s19 = sphi 0, %s23
      %p20 = scmp.ge.s32.totalorder %s19, 4
      %s29 = sphi 0, %s31
      %s32 = sphi 0, %s29
      %s33 = sphi 0, %s32
      %s49 = sphi 0, %s33
      %s53 = sphi 0, %s53
      %s55 = sphi 0, %s53
      %s56 = sphi 0, %s55
      %s70 = sphi 0, %s56
      %s74 = sphi 0, %s74
      %s76 = sphi 0, %s74
      %s77 = sphi 0, %s76
      %s91 = sphi 0, %s77
      %s95 = sphi 0, %s95
      %s97 = sphi 0, %s95
      %s98 = sphi 0, %s97
      %s112 = sphi 0, %s98
      %s116 = sphi 0, %s116
      %s118 = sphi 0, %s116
      %s119 = sphi 0, %s118
      %s133 = sphi 0, %s119
      %s139 = sphi 0, %s141
      %s142 = sphi 0, %s139
      %s143 = sphi 0, %s142
      %s159 = sphi 0, %s143
    $region4: #{tpu_custom_call.1} parent=1 // loop_header_branch
      %22 = sbr.rel (%p20) target = $region8
    $region5: #{tpu_custom_call.1} parent=1 // loop_body
      %s24 = ssub.s32 %s19, 1
      %s25 = ssub.s32 %s19, 2
      %s26 = sadd.s32 %s19, 1
      %s27 = ssub.s32 %s19, %s26
      %p28 = scmp.eq.s32.totalorder %s27, 0
      %s30 = sadd.s32 %s29, 1
      %s31 = scalar_select %p28, %s29, %s30
      %p34 = pneg %p28
      %p35 = scmp.eq.s32.totalorder %s19, 1
      %p36 = por %p34, %p35
      %p37 = scmp.ne.s32.totalorder %s29, %s32
      %p38 = scmp.eq.s32.totalorder %s19, 0
      %p39 = por %p37, %p38
      %p40 = scmp.ne.s32.totalorder %s29, %s32
      %p41 = scmp.eq.s32.totalorder %s24, 1
      %p42 = por %p40, %p41
      %p43 = scmp.ne.s32.totalorder %s32, %s33
      %p44 = scmp.eq.s32.totalorder %s24, 0
      %p45 = por %p43, %p44
      %p46 = scmp.ne.s32.totalorder %s32, %s33
      %p47 = scmp.eq.s32.totalorder %s25, 1
      %p48 = por %p46, %p47
      %p50 = scmp.ne.s32.totalorder %s33, %s49
      %p51 = scmp.eq.s32.totalorder %s25, 0
      %p52 = por %p50, %p51
      %s54 = sadd.s32 %s53, 1
      %p57 = scmp.eq.s32.totalorder %s19, 1
      %p58 = scmp.ne.s32.totalorder %s53, %s55
      %p59 = scmp.eq.s32.totalorder %s19, 0
      %p60 = por %p58, %p59
      %p61 = scmp.ne.s32.totalorder %s53, %s55
      %p62 = scmp.eq.s32.totalorder %s24, 1
      %p63 = por %p61, %p62
      %p64 = scmp.ne.s32.totalorder %s55, %s56
      %p65 = scmp.eq.s32.totalorder %s24, 0
      %p66 = por %p64, %p65
      %p67 = scmp.ne.s32.totalorder %s55, %s56
      %p68 = scmp.eq.s32.totalorder %s25, 1
      %p69 = por %p67, %p68
      %p71 = scmp.ne.s32.totalorder %s56, %s70
      %p72 = scmp.eq.s32.totalorder %s25, 0
      %p73 = por %p71, %p72
      %s75 = sadd.s32 %s74, 1
      %p78 = scmp.eq.s32.totalorder %s19, 1
      %p79 = scmp.ne.s32.totalorder %s74, %s76
      %p80 = scmp.eq.s32.totalorder %s19, 0
      %p81 = por %p79, %p80
      %p82 = scmp.ne.s32.totalorder %s74, %s76
      %p83 = scmp.eq.s32.totalorder %s24, 1
      %p84 = por %p82, %p83
      %p85 = scmp.ne.s32.totalorder %s76, %s77
      %p86 = scmp.eq.s32.totalorder %s24, 0
      %p87 = por %p85, %p86
      %p88 = scmp.ne.s32.totalorder %s76, %s77
      %p89 = scmp.eq.s32.totalorder %s25, 1
      %p90 = por %p88, %p89
      %p92 = scmp.ne.s32.totalorder %s77, %s91
      %p93 = scmp.eq.s32.totalorder %s25, 0
      %p94 = por %p92, %p93
      %s96 = sadd.s32 %s95, 1
      %p99 = scmp.eq.s32.totalorder %s19, 1
      %p100 = scmp.ne.s32.totalorder %s95, %s97
      %p101 = scmp.eq.s32.totalorder %s19, 0
      %p102 = por %p100, %p101
      %p103 = scmp.ne.s32.totalorder %s95, %s97
      %p104 = scmp.eq.s32.totalorder %s24, 1
      %p105 = por %p103, %p104
      %p106 = scmp.ne.s32.totalorder %s97, %s98
      %p107 = scmp.eq.s32.totalorder %s24, 0
      %p108 = por %p106, %p107
      %p109 = scmp.ne.s32.totalorder %s97, %s98
      %p110 = scmp.eq.s32.totalorder %s25, 1
      %p111 = por %p109, %p110
      %p113 = scmp.ne.s32.totalorder %s98, %s112
      %p114 = scmp.eq.s32.totalorder %s25, 0
      %p115 = por %p113, %p114
      %s117 = sadd.s32 %s116, 1
      %p120 = scmp.eq.s32.totalorder %s19, 1
      %p121 = scmp.ne.s32.totalorder %s116, %s118
      %p122 = scmp.eq.s32.totalorder %s19, 0
      %p123 = por %p121, %p122
      %p124 = scmp.ne.s32.totalorder %s116, %s118
      %p125 = scmp.eq.s32.totalorder %s24, 1
      %p126 = por %p124, %p125
      %p127 = scmp.ne.s32.totalorder %s118, %s119
      %p128 = scmp.eq.s32.totalorder %s24, 0
      %p129 = por %p127, %p128
      %p130 = scmp.ne.s32.totalorder %s118, %s119
      %p131 = scmp.eq.s32.totalorder %s25, 1
      %p132 = por %p130, %p131
      %p134 = scmp.ne.s32.totalorder %s119, %s133
      %p135 = scmp.eq.s32.totalorder %s25, 0
      %p136 = por %p134, %p135
      %s137 = ssub.s32 %s19, %s26
      %p138 = scmp.eq.s32.totalorder %s137, 0
      %s140 = sadd.s32 %s139, 1
      %s141 = scalar_select %p138, %s139, %s140
      %p144 = pneg %p138
      %p145 = scmp.eq.s32.totalorder %s19, 1
      %p146 = por %p144, %p145
      %p147 = scmp.ne.s32.totalorder %s139, %s142
      %p148 = scmp.eq.s32.totalorder %s19, 0
      %p149 = por %p147, %p148
      %p150 = scmp.ne.s32.totalorder %s139, %s142
      %p151 = scmp.eq.s32.totalorder %s24, 1
      %p152 = por %p150, %p151
      %p153 = scmp.ne.s32.totalorder %s142, %s143
      %p154 = scmp.eq.s32.totalorder %s24, 0
      %p155 = por %p153, %p154
      %p156 = scmp.ne.s32.totalorder %s142, %s143
      %p157 = scmp.eq.s32.totalorder %s25, 1
      %p158 = por %p156, %p157
      %p160 = scmp.ne.s32.totalorder %s143, %s159
      %p161 = scmp.eq.s32.totalorder %s25, 0
      %p162 = por %p160, %p161
      %p163 = scmp.le.s32.totalorder 1, %s19
      %p164 = scmp.lt.s32.totalorder %s19, 3
      %p165 = pnand %p163, %p164
      %p166 = pneg %p165
      // Predicated region
      $region9: #{tpu_custom_call.1} parent=5 // pred_check
        _
      $region10: #{tpu_custom_call.1} parent=5 // pred_check_branch
        %168 = sbr.rel (%p165) target = $region12
      $region11: #{tpu_custom_call.1} parent=5 // pred_region
        %s169 = ssub.s32 %s19, 1
        // Predicated region
        $region13: #{tpu_custom_call.1} parent=11 // pred_check
          %p170 = pneg %p66
        $region14: #{tpu_custom_call.1} parent=11 // pred_check_branch
          %172 = sbr.rel (%p170) target = $region16
        $region15: #{tpu_custom_call.1} parent=11 // pred_region
          %s174 = ssub.s32 8192, 8192
          %175 = vsyncadd [#allocation6], %s174
          %s176 = sshll.u32 [#allocation5], 4
          %s177 = int_to_ptr.vmem [resolvable:$true] %s176
          %182 = dma.hbm_to_vmem [thread:$0]  %s1, 8192, %s177, [#allocation6], 256, 256, 16
        $region16: #{tpu_custom_call.1} parent=11 // pred_fallthru
          _
        // Predicated region
        $region17: #{tpu_custom_call.1} parent=11 // pred_check
          %p183 = pneg %p87
        $region18: #{tpu_custom_call.1} parent=11 // pred_check_branch
          %185 = sbr.rel (%p183) target = $region20
        $region19: #{tpu_custom_call.1} parent=11 // pred_region
          %s187 = ssub.s32 4096, 4096
          %188 = vsyncadd [#allocation6], %s187
          %s189 = sshll.u32 [#allocation7], 4
          %s190 = int_to_ptr.vmem [resolvable:$true] %s189
          %195 = dma.hbm_to_vmem [thread:$0]  %s2, 4096, %s190, [#allocation6], 128, 128, 8
        $region20: #{tpu_custom_call.1} parent=11 // pred_fallthru
          _
        // Predicated region
        $region21: #{tpu_custom_call.1} parent=11 // pred_check
          %p196 = pneg %p108
        $region22: #{tpu_custom_call.1} parent=11 // pred_check_branch
          %198 = sbr.rel (%p196) target = $region24
        $region23: #{tpu_custom_call.1} parent=11 // pred_region
          _
        $region24: #{tpu_custom_call.1} parent=11 // pred_fallthru
          _
        // Predicated region
        $region25: #{tpu_custom_call.1} parent=11 // pred_check
          %p199 = pneg %p129
        $region26: #{tpu_custom_call.1} parent=11 // pred_check_branch
          %201 = sbr.rel (%p199) target = $region28
        $region27: #{tpu_custom_call.1} parent=11 // pred_region
          %s203 = ssub.s32 128, 128
          %204 = vsyncadd [#allocation9], %s203
          %s206 = sshll.u32 [#allocation8], 4
          %s207 = int_to_ptr.vmem [resolvable:$true] %s206
          %209 = dma.hbm_to_vmem [thread:$0]  %s4, 128, %s207, [#allocation9]
        $region28: #{tpu_custom_call.1} parent=11 // pred_fallthru
          _
      $region12: #{tpu_custom_call.1} parent=5 // pred_fallthru
        _
      %p210 = scmp.lt.s32.totalorder %s19, 2
      // Predicated region
      $region29: #{tpu_custom_call.1} parent=5 // pred_check
        %p211 = pneg %p210
      $region30: #{tpu_custom_call.1} parent=5 // pred_check_branch
        %213 = sbr.rel (%p211) target = $region32
      $region31: #{tpu_custom_call.1} parent=5 // pred_region
        // Predicated region
        $region33: #{tpu_custom_call.1} parent=31 // pred_check
          %p214 = pneg %p39
        $region34: #{tpu_custom_call.1} parent=31 // pred_check_branch
          %216 = sbr.rel (%p214) target = $region36
        $region35: #{tpu_custom_call.1} parent=31 // pred_region
          %s217 = sand.u32 %s29, 1
          %s218 = scalar_lea.sflag [#allocation3], %s217
          %s219 = sand.u32 %s29, 1
          %s220 = smul.addr %s219, 16
          %s221 = scalar_lea.vmem [#allocation2], %s220
          %s223 = ssub.s32 256, 256
          %224 = vsyncadd %s218, %s223
          %s225 = smul.addr %s19, 2
          %s226 = smul.addr %s225, 128
          %s227 = scalar_lea.hbm %s0, %s226
          %s229 = sshll.u32 %s221, 4
          %s230 = int_to_ptr.vmem [resolvable:$true] %s229
          %232 = dma.hbm_to_vmem [thread:$0]  %s227, 256, %s230, %s218
        $region36: #{tpu_custom_call.1} parent=31 // pred_fallthru
          _
      $region32: #{tpu_custom_call.1} parent=5 // pred_fallthru
        _
      %p233 = scmp.le.s32.totalorder 1, %s19
      %p234 = scmp.lt.s32.totalorder %s19, 3
      %p235 = pnand %p233, %p234
      %p236 = pneg %p235
      // Predicated region
      $region37: #{tpu_custom_call.1} parent=5 // pred_check
        _
      $region38: #{tpu_custom_call.1} parent=5 // pred_check_branch
        %238 = sbr.rel (%p235) target = $region40
      $region39: #{tpu_custom_call.1} parent=5 // pred_region
        %s239 = ssub.s32 %s19, 1
        %s240 = sand.u32 %s32, 1
        %s241 = scalar_lea.sflag [#allocation3], %s240
        %s242 = sand.u32 %s32, 1
        %s243 = smul.addr %s242, 16
        %s244 = scalar_lea.vmem [#allocation2], %s243
        // Predicated region
        $region41: #{tpu_custom_call.1} parent=39 // pred_check
          %p245 = pneg %p45
        $region42: #{tpu_custom_call.1} parent=39 // pred_check_branch
          %247 = sbr.rel (%p245) target = $region44
        $region43: #{tpu_custom_call.1} parent=39 // pred_region
          %248 = dma.done %s241, 256
        $region44: #{tpu_custom_call.1} parent=39 // pred_fallthru
          _
        // Predicated region
        $region45: #{tpu_custom_call.1} parent=39 // pred_check
          %p249 = pneg %p66
        $region46: #{tpu_custom_call.1} parent=39 // pred_check_branch
          %251 = sbr.rel (%p249) target = $region48
        $region47: #{tpu_custom_call.1} parent=39 // pred_region
          %252 = dma.done [#allocation6], 8192
        $region48: #{tpu_custom_call.1} parent=39 // pred_fallthru
          _
        // Predicated region
        $region49: #{tpu_custom_call.1} parent=39 // pred_check
          %p253 = pneg %p87
        $region50: #{tpu_custom_call.1} parent=39 // pred_check_branch
          %255 = sbr.rel (%p253) target = $region52
        $region51: #{tpu_custom_call.1} parent=39 // pred_region
          %256 = dma.done [#allocation6], 4096
        $region52: #{tpu_custom_call.1} parent=39 // pred_fallthru
          _
        // Predicated region
        $region53: #{tpu_custom_call.1} parent=39 // pred_check
          %p257 = pneg %p129
        $region54: #{tpu_custom_call.1} parent=39 // pred_check_branch
          %259 = sbr.rel (%p257) target = $region56
        $region55: #{tpu_custom_call.1} parent=39 // pred_region
          %260 = dma.done [#allocation9], 128
        $region56: #{tpu_custom_call.1} parent=39 // pred_fallthru
          _
        %s261 = sand.u32 %s32, 1
        %s262 = scalar_lea.sflag [#allocation3], %s261
        %s263 = sand.u32 %s32, 1
        %s264 = smul.addr %s263, 16
        %s265 = scalar_lea.vmem [#allocation2], %s264
        %p266 = pneg %p45
        %p267 = pneg %p42
        %p268 = pneg %p66
        %p269 = pneg %p63
        %p270 = pneg %p87
        %p271 = pneg %p84
        %p272 = pneg %p108
        %p273 = pneg %p105
        %p274 = pneg %p129
        %p275 = pneg %p126
        %p276 = pneg %p155
        %p277 = pneg %p152
        %s278 = sand.u32 %s142, 1
        %s279 = scalar_lea.sflag [#allocation4], %s278
        %s280 = sand.u32 %s142, 1
        %s281 = smul.addr %s280, 16
        %s282 = scalar_lea.vmem [#allocation10], %s281
        %v284 = vld [vmem:[%s244] sm:$0xff]
        %v285 = vld [vmem:[%s244 + $0x8] sm:$0xff]
        %v286 = vpack.c.bf16 %v284, %v284
        %v287 = vpack.c.bf16 %v285, %v285
        %v288 = vld [vmem:[#allocation5] sm:$0xff]
        %v289 = vld [vmem:[#allocation5 + $0x8] sm:$0xff]
        %v290 = vld [vmem:[#allocation5 + $0x10] sm:$0xff]
        %v291 = vld [vmem:[#allocation5 + $0x18] sm:$0xff]
        %v292 = vld [vmem:[#allocation5 + $0x20] sm:$0xff]
        %v293 = vld [vmem:[#allocation5 + $0x28] sm:$0xff]
        %v294 = vld [vmem:[#allocation5 + $0x30] sm:$0xff]
        %v295 = vld [vmem:[#allocation5 + $0x38] sm:$0xff]
        %v296 = vld [vmem:[#allocation5 + $0x40] sm:$0xff]
        %v297 = vld [vmem:[#allocation5 + $0x48] sm:$0xff]
        %v298 = vld [vmem:[#allocation5 + $0x50] sm:$0xff]
        %v299 = vld [vmem:[#allocation5 + $0x58] sm:$0xff]
        %v300 = vld [vmem:[#allocation5 + $0x60] sm:$0xff]
        %v301 = vld [vmem:[#allocation5 + $0x68] sm:$0xff]
        %v302 = vld [vmem:[#allocation5 + $0x70] sm:$0xff]
        %v303 = vld [vmem:[#allocation5 + $0x78] sm:$0xff]
        %v304 = vld [vmem:[#allocation5 + $0x80] sm:$0xff]
        %v305 = vld [vmem:[#allocation5 + $0x88] sm:$0xff]
        %v306 = vld [vmem:[#allocation5 + $0x90] sm:$0xff]
        %v307 = vld [vmem:[#allocation5 + $0x98] sm:$0xff]
        %v308 = vld [vmem:[#allocation5 + $0xa0] sm:$0xff]
        %v309 = vld [vmem:[#allocation5 + $0xa8] sm:$0xff]
        %v310 = vld [vmem:[#allocation5 + $0xb0] sm:$0xff]
        %v311 = vld [vmem:[#allocation5 + $0xb8] sm:$0xff]
        %v312 = vld [vmem:[#allocation5 + $0xc0] sm:$0xff]
        %v313 = vld [vmem:[#allocation5 + $0xc8] sm:$0xff]
        %v314 = vld [vmem:[#allocation5 + $0xd0] sm:$0xff]
        %v315 = vld [vmem:[#allocation5 + $0xd8] sm:$0xff]
        %v316 = vld [vmem:[#allocation5 + $0xe0] sm:$0xff]
        %v317 = vld [vmem:[#allocation5 + $0xe8] sm:$0xff]
        %v318 = vld [vmem:[#allocation5 + $0xf0] sm:$0xff]
        %v319 = vld [vmem:[#allocation5 + $0xf8] sm:$0xff]
        %v320 = vld [vmem:[#allocation5 + $0x100] sm:$0xff]
        %v321 = vld [vmem:[#allocation5 + $0x108] sm:$0xff]
        %v322 = vld [vmem:[#allocation5 + $0x110] sm:$0xff]
        %v323 = vld [vmem:[#allocation5 + $0x118] sm:$0xff]
        %v324 = vld [vmem:[#allocation5 + $0x120] sm:$0xff]
        %v325 = vld [vmem:[#allocation5 + $0x128] sm:$0xff]
        %v326 = vld [vmem:[#allocation5 + $0x130] sm:$0xff]
        %v327 = vld [vmem:[#allocation5 + $0x138] sm:$0xff]
        %v328 = vld [vmem:[#allocation5 + $0x140] sm:$0xff]
        %v329 = vld [vmem:[#allocation5 + $0x148] sm:$0xff]
        %v330 = vld [vmem:[#allocation5 + $0x150] sm:$0xff]
        %v331 = vld [vmem:[#allocation5 + $0x158] sm:$0xff]
        %v332 = vld [vmem:[#allocation5 + $0x160] sm:$0xff]
        %v333 = vld [vmem:[#allocation5 + $0x168] sm:$0xff]
        %v334 = vld [vmem:[#allocation5 + $0x170] sm:$0xff]
        %v335 = vld [vmem:[#allocation5 + $0x178] sm:$0xff]
        %v336 = vld [vmem:[#allocation5 + $0x180] sm:$0xff]
        %v337 = vld [vmem:[#allocation5 + $0x188] sm:$0xff]
        %v338 = vld [vmem:[#allocation5 + $0x190] sm:$0xff]
        %v339 = vld [vmem:[#allocation5 + $0x198] sm:$0xff]
        %v340 = vld [vmem:[#allocation5 + $0x1a0] sm:$0xff]
        %v341 = vld [vmem:[#allocation5 + $0x1a8] sm:$0xff]
        %v342 = vld [vmem:[#allocation5 + $0x1b0] sm:$0xff]
        %v343 = vld [vmem:[#allocation5 + $0x1b8] sm:$0xff]
        %v344 = vld [vmem:[#allocation5 + $0x1c0] sm:$0xff]
        %v345 = vld [vmem:[#allocation5 + $0x1c8] sm:$0xff]
        %v346 = vld [vmem:[#allocation5 + $0x1d0] sm:$0xff]
        %v347 = vld [vmem:[#allocation5 + $0x1d8] sm:$0xff]
        %v348 = vld [vmem:[#allocation5 + $0x1e0] sm:$0xff]
        %v349 = vld [vmem:[#allocation5 + $0x1e8] sm:$0xff]
        %v350 = vld [vmem:[#allocation5 + $0x1f0] sm:$0xff]
        %v351 = vld [vmem:[#allocation5 + $0x1f8] sm:$0xff]
        %v416 = vunpack.c.l.b16 %v288
        %v417 = vunpack.c.h.b16 %v288
        %v418 = vunpack.c.l.b16 %v289
        %v419 = vunpack.c.h.b16 %v289
        %v420 = vunpack.c.l.b16 %v290
        %v421 = vunpack.c.h.b16 %v290
        %v422 = vunpack.c.l.b16 %v291
        %v423 = vunpack.c.h.b16 %v291
        %v424 = vunpack.c.l.b16 %v292
        %v425 = vunpack.c.h.b16 %v292
        %v426 = vunpack.c.l.b16 %v293
        %v427 = vunpack.c.h.b16 %v293
        %v428 = vunpack.c.l.b16 %v294
        %v429 = vunpack.c.h.b16 %v294
        %v430 = vunpack.c.l.b16 %v295
        %v431 = vunpack.c.h.b16 %v295
        %v432 = vunpack.c.l.b16 %v296
        %v433 = vunpack.c.h.b16 %v296
        %v434 = vunpack.c.l.b16 %v297
        %v435 = vunpack.c.h.b16 %v297
        %v436 = vunpack.c.l.b16 %v298
        %v437 = vunpack.c.h.b16 %v298
        %v438 = vunpack.c.l.b16 %v299
        %v439 = vunpack.c.h.b16 %v299
        %v440 = vunpack.c.l.b16 %v300
        %v441 = vunpack.c.h.b16 %v300
        %v442 = vunpack.c.l.b16 %v301
        %v443 = vunpack.c.h.b16 %v301
        %v444 = vunpack.c.l.b16 %v302
        %v445 = vunpack.c.h.b16 %v302
        %v446 = vunpack.c.l.b16 %v303
        %v447 = vunpack.c.h.b16 %v303
        %v448 = vunpack.c.l.b16 %v304
        %v449 = vunpack.c.h.b16 %v304
        %v450 = vunpack.c.l.b16 %v305
        %v451 = vunpack.c.h.b16 %v305
        %v452 = vunpack.c.l.b16 %v306
        %v453 = vunpack.c.h.b16 %v306
        %v454 = vunpack.c.l.b16 %v307
        %v455 = vunpack.c.h.b16 %v307
        %v456 = vunpack.c.l.b16 %v308
        %v457 = vunpack.c.h.b16 %v308
        %v458 = vunpack.c.l.b16 %v309
        %v459 = vunpack.c.h.b16 %v309
        %v460 = vunpack.c.l.b16 %v310
        %v461 = vunpack.c.h.b16 %v310
        %v462 = vunpack.c.l.b16 %v311
        %v463 = vunpack.c.h.b16 %v311
        %v464 = vunpack.c.l.b16 %v312
        %v465 = vunpack.c.h.b16 %v312
        %v466 = vunpack.c.l.b16 %v313
        %v467 = vunpack.c.h.b16 %v313
        %v468 = vunpack.c.l.b16 %v314
        %v469 = vunpack.c.h.b16 %v314
        %v470 = vunpack.c.l.b16 %v315
        %v471 = vunpack.c.h.b16 %v315
        %v472 = vunpack.c.l.b16 %v316
        %v473 = vunpack.c.h.b16 %v316
        %v474 = vunpack.c.l.b16 %v317
        %v475 = vunpack.c.h.b16 %v317
        %v476 = vunpack.c.l.b16 %v318
        %v477 = vunpack.c.h.b16 %v318
        %v478 = vunpack.c.l.b16 %v319
        %v479 = vunpack.c.h.b16 %v319
        %v480 = vunpack.c.l.b16 %v320
        %v481 = vunpack.c.h.b16 %v320
        %v482 = vunpack.c.l.b16 %v321
        %v483 = vunpack.c.h.b16 %v321
        %v484 = vunpack.c.l.b16 %v322
        %v485 = vunpack.c.h.b16 %v322
        %v486 = vunpack.c.l.b16 %v323
        %v487 = vunpack.c.h.b16 %v323
        %v488 = vunpack.c.l.b16 %v324
        %v489 = vunpack.c.h.b16 %v324
        %v490 = vunpack.c.l.b16 %v325
        %v491 = vunpack.c.h.b16 %v325
        %v492 = vunpack.c.l.b16 %v326
        %v493 = vunpack.c.h.b16 %v326
        %v494 = vunpack.c.l.b16 %v327
        %v495 = vunpack.c.h.b16 %v327
        %v496 = vunpack.c.l.b16 %v328
        %v497 = vunpack.c.h.b16 %v328
        %v498 = vunpack.c.l.b16 %v329
        %v499 = vunpack.c.h.b16 %v329
        %v500 = vunpack.c.l.b16 %v330
        %v501 = vunpack.c.h.b16 %v330
        %v502 = vunpack.c.l.b16 %v331
        %v503 = vunpack.c.h.b16 %v331
        %v504 = vunpack.c.l.b16 %v332
        %v505 = vunpack.c.h.b16 %v332
        %v506 = vunpack.c.l.b16 %v333
        %v507 = vunpack.c.h.b16 %v333
        %v508 = vunpack.c.l.b16 %v334
        %v509 = vunpack.c.h.b16 %v334
        %v510 = vunpack.c.l.b16 %v335
        %v511 = vunpack.c.h.b16 %v335
        %v512 = vunpack.c.l.b16 %v336
        %v513 = vunpack.c.h.b16 %v336
        %v514 = vunpack.c.l.b16 %v337
        %v515 = vunpack.c.h.b16 %v337
        %v516 = vunpack.c.l.b16 %v338
        %v517 = vunpack.c.h.b16 %v338
        %v518 = vunpack.c.l.b16 %v339
        %v519 = vunpack.c.h.b16 %v339
        %v520 = vunpack.c.l.b16 %v340
        %v521 = vunpack.c.h.b16 %v340
        %v522 = vunpack.c.l.b16 %v341
        %v523 = vunpack.c.h.b16 %v341
        %v524 = vunpack.c.l.b16 %v342
        %v525 = vunpack.c.h.b16 %v342
        %v526 = vunpack.c.l.b16 %v343
        %v527 = vunpack.c.h.b16 %v343
        %v528 = vunpack.c.l.b16 %v344
        %v529 = vunpack.c.h.b16 %v344
        %v530 = vunpack.c.l.b16 %v345
        %v531 = vunpack.c.h.b16 %v345
        %v532 = vunpack.c.l.b16 %v346
        %v533 = vunpack.c.h.b16 %v346
        %v534 = vunpack.c.l.b16 %v347
        %v535 = vunpack.c.h.b16 %v347
        %v536 = vunpack.c.l.b16 %v348
        %v537 = vunpack.c.h.b16 %v348
        %v538 = vunpack.c.l.b16 %v349
        %v539 = vunpack.c.h.b16 %v349
        %v540 = vunpack.c.l.b16 %v350
        %v541 = vunpack.c.h.b16 %v350
        %v542 = vunpack.c.l.b16 %v351
        %v543 = vunpack.c.h.b16 %v351
        %v544 = vpack.c.b16 %v420, %v416
        %v545 = vpack.c.b16 %v421, %v417
        %v546 = vpack.c.b16 %v422, %v418
        %v547 = vpack.c.b16 %v423, %v419
        %v548 = vpack.c.b16 %v428, %v424
        %v549 = vpack.c.b16 %v429, %v425
        %v550 = vpack.c.b16 %v430, %v426
        %v551 = vpack.c.b16 %v431, %v427
        %v552 = vpack.c.b16 %v436, %v432
        %v553 = vpack.c.b16 %v437, %v433
        %v554 = vpack.c.b16 %v438, %v434
        %v555 = vpack.c.b16 %v439, %v435
        %v556 = vpack.c.b16 %v444, %v440
        %v557 = vpack.c.b16 %v445, %v441
        %v558 = vpack.c.b16 %v446, %v442
        %v559 = vpack.c.b16 %v447, %v443
        %v560 = vpack.c.b16 %v452, %v448
        %v561 = vpack.c.b16 %v453, %v449
        %v562 = vpack.c.b16 %v454, %v450
        %v563 = vpack.c.b16 %v455, %v451
        %v564 = vpack.c.b16 %v460, %v456
        %v565 = vpack.c.b16 %v461, %v457
        %v566 = vpack.c.b16 %v462, %v458
        %v567 = vpack.c.b16 %v463, %v459
        %v568 = vpack.c.b16 %v468, %v464
        %v569 = vpack.c.b16 %v469, %v465
        %v570 = vpack.c.b16 %v470, %v466
        %v571 = vpack.c.b16 %v471, %v467
        %v572 = vpack.c.b16 %v476, %v472
        %v573 = vpack.c.b16 %v477, %v473
        %v574 = vpack.c.b16 %v478, %v474
        %v575 = vpack.c.b16 %v479, %v475
        %v576 = vpack.c.b16 %v484, %v480
        %v577 = vpack.c.b16 %v485, %v481
        %v578 = vpack.c.b16 %v486, %v482
        %v579 = vpack.c.b16 %v487, %v483
        %v580 = vpack.c.b16 %v492, %v488
        %v581 = vpack.c.b16 %v493, %v489
        %v582 = vpack.c.b16 %v494, %v490
        %v583 = vpack.c.b16 %v495, %v491
        %v584 = vpack.c.b16 %v500, %v496
        %v585 = vpack.c.b16 %v501, %v497
        %v586 = vpack.c.b16 %v502, %v498
        %v587 = vpack.c.b16 %v503, %v499
        %v588 = vpack.c.b16 %v508, %v504
        %v589 = vpack.c.b16 %v509, %v505
        %v590 = vpack.c.b16 %v510, %v506
        %v591 = vpack.c.b16 %v511, %v507
        %v592 = vpack.c.b16 %v516, %v512
        %v593 = vpack.c.b16 %v517, %v513
        %v594 = vpack.c.b16 %v518, %v514
        %v595 = vpack.c.b16 %v519, %v515
        %v596 = vpack.c.b16 %v524, %v520
        %v597 = vpack.c.b16 %v525, %v521
        %v598 = vpack.c.b16 %v526, %v522
        %v599 = vpack.c.b16 %v527, %v523
        %v600 = vpack.c.b16 %v532, %v528
        %v601 = vpack.c.b16 %v533, %v529
        %v602 = vpack.c.b16 %v534, %v530
        %v603 = vpack.c.b16 %v535, %v531
        %v604 = vpack.c.b16 %v540, %v536
        %v605 = vpack.c.b16 %v541, %v537
        %v606 = vpack.c.b16 %v542, %v538
        %v607 = vpack.c.b16 %v543, %v539
        %672 = vmatprep.subr.bf16.mxu0 %v545
        %673 = vmatpush1.bf16.msra.mxu0 %v544
        %674 = vmatprep.subr.bf16.mxu0 %v549
        %675 = vmatpush1.bf16.msra.mxu0 %v548
        %676 = vmatprep.subr.bf16.mxu0 %v553
        %677 = vmatpush1.bf16.msra.mxu0 %v552
        %678 = vmatprep.subr.bf16.mxu0 %v557
        %679 = vmatpush1.bf16.msra.mxu0 %v556
        %680 = vmatprep.subr.bf16.mxu0 %v561
        %681 = vmatpush1.bf16.msra.mxu0 %v560
        %682 = vmatprep.subr.bf16.mxu0 %v565
        %683 = vmatpush1.bf16.msra.mxu0 %v564
        %684 = vmatprep.subr.bf16.mxu0 %v569
        %685 = vmatpush1.bf16.msra.mxu0 %v568
        %686 = vmatprep.subr.bf16.mxu0 %v573
        %687 = vmatpush1.bf16.msra.mxu0 %v572
        %688 = vmatprep.subr.bf16.mxu0 %v577
        %689 = vmatpush1.bf16.msra.mxu0 %v576
        %690 = vmatprep.subr.bf16.mxu0 %v581
        %691 = vmatpush1.bf16.msra.mxu0 %v580
        %692 = vmatprep.subr.bf16.mxu0 %v585
        %693 = vmatpush1.bf16.msra.mxu0 %v584
        %694 = vmatprep.subr.bf16.mxu0 %v589
        %695 = vmatpush1.bf16.msra.mxu0 %v588
        %696 = vmatprep.subr.bf16.mxu0 %v593
        %697 = vmatpush1.bf16.msra.mxu0 %v592
        %698 = vmatprep.subr.bf16.mxu0 %v597
        %699 = vmatpush1.bf16.msra.mxu0 %v596
        %700 = vmatprep.subr.bf16.mxu0 %v601
        %701 = vmatpush1.bf16.msra.mxu0 %v600
        %702 = vmatprep.subr.bf16.mxu0 %v605
        %703 = vmatpush1.bf16.msra.mxu0 %v604
        %704 = vmatprep.mubr.bf16.mxu0 %v287
        %705 = vmatmul.mubr.bf16.gmra.mrb[0].mxu0 %v286
        %v706 = vpop.f32.mrb[0].mxu0
        %v707 = vadd.f32 0.0, %v706
        %v708 = vpop.f32.mrb[0].mxu0
        %v709 = vadd.f32 0.0, %v708
        %v710 = vpop.f32.mrb[0].mxu0
        %v711 = vpop.f32.mrb[0].mxu0
        %712 = vdwg.mxu0
        %713 = vmatprep.subr.bf16.mxu0 %v547
        %714 = vmatpush1.bf16.msra.mxu0 %v546
        %715 = vmatprep.subr.bf16.mxu0 %v551
        %716 = vmatpush1.bf16.msra.mxu0 %v550
        %717 = vmatprep.subr.bf16.mxu0 %v555
        %718 = vmatpush1.bf16.msra.mxu0 %v554
        %719 = vmatprep.subr.bf16.mxu0 %v559
        %720 = vmatpush1.bf16.msra.mxu0 %v558
        %721 = vmatprep.subr.bf16.mxu0 %v563
        %722 = vmatpush1.bf16.msra.mxu0 %v562
        %723 = vmatprep.subr.bf16.mxu0 %v567
        %724 = vmatpush1.bf16.msra.mxu0 %v566
        %725 = vmatprep.subr.bf16.mxu0 %v571
        %726 = vmatpush1.bf16.msra.mxu0 %v570
        %727 = vmatprep.subr.bf16.mxu0 %v575
        %728 = vmatpush1.bf16.msra.mxu0 %v574
        %729 = vmatprep.subr.bf16.mxu0 %v579
        %730 = vmatpush1.bf16.msra.mxu0 %v578
        %731 = vmatprep.subr.bf16.mxu0 %v583
        %732 = vmatpush1.bf16.msra.mxu0 %v582
        %733 = vmatprep.subr.bf16.mxu0 %v587
        %734 = vmatpush1.bf16.msra.mxu0 %v586
        %735 = vmatprep.subr.bf16.mxu0 %v591
        %736 = vmatpush1.bf16.msra.mxu0 %v590
        %737 = vmatprep.subr.bf16.mxu0 %v595
        %738 = vmatpush1.bf16.msra.mxu0 %v594
        %739 = vmatprep.subr.bf16.mxu0 %v599
        %740 = vmatpush1.bf16.msra.mxu0 %v598
        %741 = vmatprep.subr.bf16.mxu0 %v603
        %742 = vmatpush1.bf16.msra.mxu0 %v602
        %743 = vmatprep.subr.bf16.mxu0 %v607
        %744 = vmatpush1.bf16.msra.mxu0 %v606
        %745 = vmatprep.mubr.bf16.mxu0 %v287
        %746 = vmatmul.mubr.bf16.gmra.mrb[0].mxu0 %v286
        %v747 = vpop.f32.mrb[0].mxu0
        %v748 = vadd.f32 0.0, %v747
        %v749 = vpop.f32.mrb[0].mxu0
        %v750 = vadd.f32 0.0, %v749
        %v751 = vpop.f32.mrb[0].mxu0
        %v752 = vpop.f32.mrb[0].mxu0
        %753 = vdwg.mxu0
        %v754 = vld [vmem:[%s3] sm:$0xff]
        %v755 = vld [vmem:[#allocation8] sm:$0xff]
        %v756 = vlaneseq
        %v757 = vshrl.u32 %v756, 7
        %v758 = vadd.s32 %v757, 8
        %vm759 = vcmp.lt.s32.totalorder %v757, 0
        %v760 = vsub.s32 0, %v757
        %v761 = vsel %vm759, %v760, %v757
        %v762 = vshrl.u32 %v761, 3
        %v763 = vand.u32 %v761, 7
        %v764 = vsub.s32 0, %v763
        %v765 = vsel %vm759, %v764, %v763
        %vm766 = vcmp.lt.s32.totalorder %v758, 0
        %v767 = vsub.s32 0, %v758
        %v768 = vsel %vm766, %v767, %v758
        %v769 = vshrl.u32 %v768, 3
        %v770 = vand.u32 %v768, 7
        %v771 = vsub.s32 0, %v770
        %v772 = vsel %vm766, %v771, %v770
        %vm773 = vcmp.ne.s32.totalorder %v765, 0
        %vm774 = vcmp.ne.s32.totalorder %v772, 0
        %vm775 = vcmp.lt.s32.totalorder %v765, 0
        %vm776 = vcmp.lt.s32.totalorder %v772, 0
        %vm777 = vmand %vm775, %vm773
        %vm778 = vmand %vm776, %vm774
        %v779 = vadd.s32 %v765, 8
        %v780 = vadd.s32 %v772, 8
        %v781 = vsel %vm777, %v779, %v765
        %v782 = vsel %vm778, %v780, %v772
        %v783 = vlaneseq
        %v784 = vand.u32 %v783, 127
        %vm785 = vcmp.ge.s32.totalorder %v781, %v784
        %vm786 = vcmp.ge.s32.totalorder %v782, %v784
        %v787 = vsub.f32 0.0, %v748
        %789 = vrot.lane.b32.xlu0 %v787, 64
        %v790 = vpop.permute.xlu0 %789
        %793 = vrot.lane.b32.xlu0 %v748, 64
        %v794 = vpop.permute.xlu0 %793
        %vm796 = vcmask 523264
        %v797 = vsel %vm796, %v790, %v794
        %v798 = vmul.f32 %v748, %v754
        %v799 = vmul.f32 %v797, %v755
        %v800 = vadd.f32 %v798, %v799
        %v801 = vsub.f32 0.0, %v707
        %803 = vrot.lane.b32.xlu0 %v801, 64
        %v804 = vpop.permute.xlu0 %803
        %807 = vrot.lane.b32.xlu0 %v707, 64
        %v808 = vpop.permute.xlu0 %807
        %v810 = vsel %vm796, %v804, %v808
        %v811 = vmul.f32 %v707, %v754
        %v812 = vmul.f32 %v810, %v755
        %v813 = vadd.f32 %v811, %v812
        %v814 = vmul.f32 %v813, 0.088388346
        %v815 = vsub.f32 0.0, %v709
        %817 = vrot.lane.b32.xlu0 %v815, 64
        %v818 = vpop.permute.xlu0 %817
        %821 = vrot.lane.b32.xlu0 %v709, 64
        %v822 = vpop.permute.xlu0 %821
        %v824 = vsel %vm796, %v818, %v822
        %v825 = vmul.f32 %v709, %v754
        %v826 = vmul.f32 %v824, %v755
        %v827 = vadd.f32 %v825, %v826
        %v828 = vmul.f32 %v827, 0.088388346
        %v829 = vpack.c.bf16 %v828, %v814
        %v830 = vpack.c.bf16 %v800, %v800
        %831 = vmatprep.subr.bf16.mxu0 0
        %832 = vmatpush1.bf16.xpose.msra.mxu0 %v830
        %833 = vmatprep.subr.bf16.mxu0 0
        %834 = vmatpush1.bf16.xpose.msra.mxu0 0
        %835 = vmatprep.subr.bf16.mxu0 0
        %836 = vmatpush1.bf16.xpose.msra.mxu0 0
        %837 = vmatprep.subr.bf16.mxu0 0
        %838 = vmatpush1.bf16.xpose.msra.mxu0 0
        %839 = vmatprep.subr.bf16.mxu0 0
        %840 = vmatpush1.bf16.xpose.msra.mxu0 0
        %841 = vmatprep.subr.bf16.mxu0 0
        %842 = vmatpush1.bf16.xpose.msra.mxu0 0
        %843 = vmatprep.subr.bf16.mxu0 0
        %844 = vmatpush1.bf16.xpose.msra.mxu0 0
        %845 = vmatprep.subr.bf16.mxu0 0
        %846 = vmatpush1.bf16.xpose.msra.mxu0 0
        %847 = vmatprep.subr.bf16.mxu0 0
        %848 = vmatpush1.bf16.xpose.msra.mxu0 0
        %849 = vmatprep.subr.bf16.mxu0 0
        %850 = vmatpush1.bf16.xpose.msra.mxu0 0
        %851 = vmatprep.subr.bf16.mxu0 0
        %852 = vmatpush1.bf16.xpose.msra.mxu0 0
        %853 = vmatprep.subr.bf16.mxu0 0
        %854 = vmatpush1.bf16.xpose.msra.mxu0 0
        %855 = vmatprep.subr.bf16.mxu0 0
        %856 = vmatpush1.bf16.xpose.msra.mxu0 0
        %857 = vmatprep.subr.bf16.mxu0 0
        %858 = vmatpush1.bf16.xpose.msra.mxu0 0
        %859 = vmatprep.subr.bf16.mxu0 0
        %860 = vmatpush1.bf16.xpose.msra.mxu0 0
        %861 = vmatprep.subr.bf16.mxu0 0
        %862 = vmatpush1.bf16.xpose.msra.mxu0 0
        %863 = vmatprep.mubr.bf16.mxu0 0
        %864 = vmatmul.mubr.bf16.gmra.mrb[0].mxu0 %v829
        %v865 = vpop.f32.mrb[0].mxu0
        %v866 = vadd.f32 0.0, %v865
        %v867 = vpop.f32.mrb[0].mxu0
        %v868 = vpop.f32.mrb[0].mxu0
        %v869 = vadd.f32 0.0, %v868
        %v870 = vpop.f32.mrb[0].mxu0
        %871 = vdwg.mxu0
        %v872 = vsel %vm785, %v866, -1e+30
        %v873 = vsel %vm786, %v869, -1e+30
        %vm874 = vcmask 64512
        %v875 = vsel %vm874, %v872, -inf
        %876 = vmax.xlane.f32.xlu0 %v875
        %v877 = vpop.xlane.xlu0 %876
        %v878 = vsel %vm874, %v873, -inf
        %879 = vmax.xlane.f32.xlu0 %v878
        %v880 = vpop.xlane.xlu0 %879
        %v881 = vsub.f32 %v872, %v877
        %v882 = vsub.f32 %v873, %v880
        %v883 = vmul.f32 %v881, 1.442695
        %v884 = vpow.pop %v883
        %v885 = vmul.f32 %v882, 1.442695
        %v886 = vpow.pop %v885
        %v887 = vsel %vm874, %v884, 0.0
        %888 = vadd.xlane.f32.xlu0 %v887
        %v889 = vpop.xlane.xlu0 %888
        %v890 = vsel %vm874, %v886, 0.0
        %891 = vadd.xlane.f32.xlu0 %v890
        %v892 = vpop.xlane.xlu0 %891
        %v893 = vrcp.pop %v889
        %v894 = vmul.f32 %v884, %v893
        %v895 = vrcp.pop %v892
        %v896 = vmul.f32 %v886, %v895
        %v897 = vpack.c.bf16 %v896, %v894
        %v898 = vpack.c.bf16 %v750, %v750
        %v900 = vsel %vm874, %v897, 0
        %vm902 = vcmask 1043456
        %v904 = vsel %vm902, %v898, 0
        %906 = vmatprep.subr.bf16.mxu0 0
        %907 = vmatpush1.bf16.msra.mxu0 %v904
        %908 = vmatprep.subr.bf16.mxu0 0
        %909 = vmatpush1.bf16.msra.mxu0 0
        %910 = vmatprep.subr.bf16.mxu0 0
        %911 = vmatpush1.bf16.msra.mxu0 0
        %912 = vmatprep.subr.bf16.mxu0 0
        %913 = vmatpush1.bf16.msra.mxu0 0
        %914 = vmatprep.subr.bf16.mxu0 0
        %915 = vmatpush1.bf16.msra.mxu0 0
        %916 = vmatprep.subr.bf16.mxu0 0
        %917 = vmatpush1.bf16.msra.mxu0 0
        %918 = vmatprep.subr.bf16.mxu0 0
        %919 = vmatpush1.bf16.msra.mxu0 0
        %920 = vmatprep.subr.bf16.mxu0 0
        %921 = vmatpush1.bf16.msra.mxu0 0
        %922 = vmatprep.subr.bf16.mxu0 0
        %923 = vmatpush1.bf16.msra.mxu0 0
        %924 = vmatprep.subr.bf16.mxu0 0
        %925 = vmatpush1.bf16.msra.mxu0 0
        %926 = vmatprep.subr.bf16.mxu0 0
        %927 = vmatpush1.bf16.msra.mxu0 0
        %928 = vmatprep.subr.bf16.mxu0 0
        %929 = vmatpush1.bf16.msra.mxu0 0
        %930 = vmatprep.subr.bf16.mxu0 0
        %931 = vmatpush1.bf16.msra.mxu0 0
        %932 = vmatprep.subr.bf16.mxu0 0
        %933 = vmatpush1.bf16.msra.mxu0 0
        %934 = vmatprep.subr.bf16.mxu0 0
        %935 = vmatpush1.bf16.msra.mxu0 0
        %936 = vmatprep.subr.bf16.mxu0 0
        %937 = vmatpush1.bf16.msra.mxu0 0
        %938 = vmatprep.mubr.bf16.mxu0 0
        %939 = vmatmul.mubr.bf16.gmra.mrb[0].mxu0 %v900
        %v940 = vpop.f32.mrb[0].mxu0
        %v941 = vadd.f32 0.0, %v940
        %v942 = vpop.f32.mrb[0].mxu0
        %v943 = vpop.f32.mrb[0].mxu0
        %v944 = vadd.f32 0.0, %v943
        %v945 = vpop.f32.mrb[0].mxu0
        %946 = vdwg.mxu0
        %v947 = vpack.c.bf16 %v941, %v941
        %v948 = vpack.c.bf16 %v944, %v944
        %v949 = vld [vmem:[#allocation7] sm:$0xff]
        %v950 = vld [vmem:[#allocation7 + $0x8] sm:$0xff]
        %v951 = vld [vmem:[#allocation7 + $0x10] sm:$0xff]
        %v952 = vld [vmem:[#allocation7 + $0x18] sm:$0xff]
        %v953 = vld [vmem:[#allocation7 + $0x20] sm:$0xff]
        %v954 = vld [vmem:[#allocation7 + $0x28] sm:$0xff]
        %v955 = vld [vmem:[#allocation7 + $0x30] sm:$0xff]
        %v956 = vld [vmem:[#allocation7 + $0x38] sm:$0xff]
        %v957 = vld [vmem:[#allocation7 + $0x40] sm:$0xff]
        %v958 = vld [vmem:[#allocation7 + $0x48] sm:$0xff]
        %v959 = vld [vmem:[#allocation7 + $0x50] sm:$0xff]
        %v960 = vld [vmem:[#allocation7 + $0x58] sm:$0xff]
        %v961 = vld [vmem:[#allocation7 + $0x60] sm:$0xff]
        %v962 = vld [vmem:[#allocation7 + $0x68] sm:$0xff]
        %v963 = vld [vmem:[#allocation7 + $0x70] sm:$0xff]
        %v964 = vld [vmem:[#allocation7 + $0x78] sm:$0xff]
        %v965 = vld [vmem:[#allocation7 + $0x80] sm:$0xff]
        %v966 = vld [vmem:[#allocation7 + $0x88] sm:$0xff]
        %v967 = vld [vmem:[#allocation7 + $0x90] sm:$0xff]
        %v968 = vld [vmem:[#allocation7 + $0x98] sm:$0xff]
        %v969 = vld [vmem:[#allocation7 + $0xa0] sm:$0xff]
        %v970 = vld [vmem:[#allocation7 + $0xa8] sm:$0xff]
        %v971 = vld [vmem:[#allocation7 + $0xb0] sm:$0xff]
        %v972 = vld [vmem:[#allocation7 + $0xb8] sm:$0xff]
        %v973 = vld [vmem:[#allocation7 + $0xc0] sm:$0xff]
        %v974 = vld [vmem:[#allocation7 + $0xc8] sm:$0xff]
        %v975 = vld [vmem:[#allocation7 + $0xd0] sm:$0xff]
        %v976 = vld [vmem:[#allocation7 + $0xd8] sm:$0xff]
        %v977 = vld [vmem:[#allocation7 + $0xe0] sm:$0xff]
        %v978 = vld [vmem:[#allocation7 + $0xe8] sm:$0xff]
        %v979 = vld [vmem:[#allocation7 + $0xf0] sm:$0xff]
        %v980 = vld [vmem:[#allocation7 + $0xf8] sm:$0xff]
        %v1013 = vunpack.c.l.b16 %v949
        %v1014 = vunpack.c.h.b16 %v949
        %v1015 = vunpack.c.l.b16 %v950
        %v1016 = vunpack.c.h.b16 %v950
        %v1017 = vunpack.c.l.b16 %v951
        %v1018 = vunpack.c.h.b16 %v951
        %v1019 = vunpack.c.l.b16 %v952
        %v1020 = vunpack.c.h.b16 %v952
        %v1021 = vunpack.c.l.b16 %v953
        %v1022 = vunpack.c.h.b16 %v953
        %v1023 = vunpack.c.l.b16 %v954
        %v1024 = vunpack.c.h.b16 %v954
        %v1025 = vunpack.c.l.b16 %v955
        %v1026 = vunpack.c.h.b16 %v955
        %v1027 = vunpack.c.l.b16 %v956
        %v1028 = vunpack.c.h.b16 %v956
        %v1029 = vunpack.c.l.b16 %v957
        %v1030 = vunpack.c.h.b16 %v957
        %v1031 = vunpack.c.l.b16 %v958
        %v1032 = vunpack.c.h.b16 %v958
        %v1033 = vunpack.c.l.b16 %v959
        %v1034 = vunpack.c.h.b16 %v959
        %v1035 = vunpack.c.l.b16 %v960
        %v1036 = vunpack.c.h.b16 %v960
        %v1037 = vunpack.c.l.b16 %v961
        %v1038 = vunpack.c.h.b16 %v961
        %v1039 = vunpack.c.l.b16 %v962
        %v1040 = vunpack.c.h.b16 %v962
        %v1041 = vunpack.c.l.b16 %v963
        %v1042 = vunpack.c.h.b16 %v963
        %v1043 = vunpack.c.l.b16 %v964
        %v1044 = vunpack.c.h.b16 %v964
        %v1045 = vunpack.c.l.b16 %v965
        %v1046 = vunpack.c.h.b16 %v965
        %v1047 = vunpack.c.l.b16 %v966
        %v1048 = vunpack.c.h.b16 %v966
        %v1049 = vunpack.c.l.b16 %v967
        %v1050 = vunpack.c.h.b16 %v967
        %v1051 = vunpack.c.l.b16 %v968
        %v1052 = vunpack.c.h.b16 %v968
        %v1053 = vunpack.c.l.b16 %v969
        %v1054 = vunpack.c.h.b16 %v969
        %v1055 = vunpack.c.l.b16 %v970
        %v1056 = vunpack.c.h.b16 %v970
        %v1057 = vunpack.c.l.b16 %v971
        %v1058 = vunpack.c.h.b16 %v971
        %v1059 = vunpack.c.l.b16 %v972
        %v1060 = vunpack.c.h.b16 %v972
        %v1061 = vunpack.c.l.b16 %v973
        %v1062 = vunpack.c.h.b16 %v973
        %v1063 = vunpack.c.l.b16 %v974
        %v1064 = vunpack.c.h.b16 %v974
        %v1065 = vunpack.c.l.b16 %v975
        %v1066 = vunpack.c.h.b16 %v975
        %v1067 = vunpack.c.l.b16 %v976
        %v1068 = vunpack.c.h.b16 %v976
        %v1069 = vunpack.c.l.b16 %v977
        %v1070 = vunpack.c.h.b16 %v977
        %v1071 = vunpack.c.l.b16 %v978
        %v1072 = vunpack.c.h.b16 %v978
        %v1073 = vunpack.c.l.b16 %v979
        %v1074 = vunpack.c.h.b16 %v979
        %v1075 = vunpack.c.l.b16 %v980
        %v1076 = vunpack.c.h.b16 %v980
        %v1077 = vpack.c.b16 %v1015, %v1013
        %v1078 = vpack.c.b16 %v1016, %v1014
        %v1079 = vpack.c.b16 %v1019, %v1017
        %v1080 = vpack.c.b16 %v1020, %v1018
        %v1081 = vpack.c.b16 %v1023, %v1021
        %v1082 = vpack.c.b16 %v1024, %v1022
        %v1083 = vpack.c.b16 %v1027, %v1025
        %v1084 = vpack.c.b16 %v1028, %v1026
        %v1085 = vpack.c.b16 %v1031, %v1029
        %v1086 = vpack.c.b16 %v1032, %v1030
        %v1087 = vpack.c.b16 %v1035, %v1033
        %v1088 = vpack.c.b16 %v1036, %v1034
        %v1089 = vpack.c.b16 %v1039, %v1037
        %v1090 = vpack.c.b16 %v1040, %v1038
        %v1091 = vpack.c.b16 %v1043, %v1041
        %v1092 = vpack.c.b16 %v1044, %v1042
        %v1093 = vpack.c.b16 %v1047, %v1045
        %v1094 = vpack.c.b16 %v1048, %v1046
        %v1095 = vpack.c.b16 %v1051, %v1049
        %v1096 = vpack.c.b16 %v1052, %v1050
        %v1097 = vpack.c.b16 %v1055, %v1053
        %v1098 = vpack.c.b16 %v1056, %v1054
        %v1099 = vpack.c.b16 %v1059, %v1057
        %v1100 = vpack.c.b16 %v1060, %v1058
        %v1101 = vpack.c.b16 %v1063, %v1061
        %v1102 = vpack.c.b16 %v1064, %v1062
        %v1103 = vpack.c.b16 %v1067, %v1065
        %v1104 = vpack.c.b16 %v1068, %v1066
        %v1105 = vpack.c.b16 %v1071, %v1069
        %v1106 = vpack.c.b16 %v1072, %v1070
        %v1107 = vpack.c.b16 %v1075, %v1073
        %v1108 = vpack.c.b16 %v1076, %v1074
        %1141 = vmatprep.subr.bf16.mxu0 %v1078
        %1142 = vmatpush1.bf16.msra.mxu0 %v1077
        %1143 = vmatprep.subr.bf16.mxu0 %v1080
        %1144 = vmatpush1.bf16.msra.mxu0 %v1079
        %1145 = vmatprep.subr.bf16.mxu0 %v1082
        %1146 = vmatpush1.bf16.msra.mxu0 %v1081
        %1147 = vmatprep.subr.bf16.mxu0 %v1084
        %1148 = vmatpush1.bf16.msra.mxu0 %v1083
        %1149 = vmatprep.subr.bf16.mxu0 %v1086
        %1150 = vmatpush1.bf16.msra.mxu0 %v1085
        %1151 = vmatprep.subr.bf16.mxu0 %v1088
        %1152 = vmatpush1.bf16.msra.mxu0 %v1087
        %1153 = vmatprep.subr.bf16.mxu0 %v1090
        %1154 = vmatpush1.bf16.msra.mxu0 %v1089
        %1155 = vmatprep.subr.bf16.mxu0 %v1092
        %1156 = vmatpush1.bf16.msra.mxu0 %v1091
        %1157 = vmatprep.subr.bf16.mxu0 %v1094
        %1158 = vmatpush1.bf16.msra.mxu0 %v1093
        %1159 = vmatprep.subr.bf16.mxu0 %v1096
        %1160 = vmatpush1.bf16.msra.mxu0 %v1095
        %1161 = vmatprep.subr.bf16.mxu0 %v1098
        %1162 = vmatpush1.bf16.msra.mxu0 %v1097
        %1163 = vmatprep.subr.bf16.mxu0 %v1100
        %1164 = vmatpush1.bf16.msra.mxu0 %v1099
        %1165 = vmatprep.subr.bf16.mxu0 %v1102
        %1166 = vmatpush1.bf16.msra.mxu0 %v1101
        %1167 = vmatprep.subr.bf16.mxu0 %v1104
        %1168 = vmatpush1.bf16.msra.mxu0 %v1103
        %1169 = vmatprep.subr.bf16.mxu0 %v1106
        %1170 = vmatpush1.bf16.msra.mxu0 %v1105
        %1171 = vmatprep.subr.bf16.mxu0 %v1108
        %1172 = vmatpush1.bf16.msra.mxu0 %v1107
        %1173 = vmatprep.mubr.bf16.mxu0 %v948
        %1174 = vmatmul.mubr.bf16.gmra.mrb[0].mxu0 %v947
        %v1175 = vpop.f32.mrb[0].mxu0
        %v1176 = vadd.f32 0.0, %v1175
        %v1177 = vpop.f32.mrb[0].mxu0
        %v1178 = vadd.f32 0.0, %v1177
        %v1179 = vpop.f32.mrb[0].mxu0
        %v1180 = vpop.f32.mrb[0].mxu0
        %1181 = vdwg.mxu0
        %1182 = vst [vmem:[%s282] sm:$0xff] %v1176
        %1183 = vst [vmem:[%s282 + $0x8] sm:$0xff] %v1178
        %s1184 = sand.u32 %s142, 1
        %s1185 = scalar_lea.sflag [#allocation4], %s1184
        %s1186 = sand.u32 %s142, 1
        %s1187 = smul.addr %s1186, 16
        %s1188 = scalar_lea.vmem [#allocation10], %s1187
        // Predicated region
        $region57: #{tpu_custom_call.1} parent=39 // pred_check
          %p1189 = pneg %p152
        $region58: #{tpu_custom_call.1} parent=39 // pred_check_branch
          %1191 = sbr.rel (%p1189) target = $region60
        $region59: #{tpu_custom_call.1} parent=39 // pred_region
          %s1193 = ssub.s32 256, 256
          %1194 = vsyncadd %s1185, %s1193
          %s1195 = smul.addr %s24, 2
          %s1196 = smul.addr %s1195, 128
          %s1197 = scalar_lea.hbm %s5, %s1196
          %s1199 = sshll.u32 %s1188, 4
          %s1200 = int_to_ptr.vmem [resolvable:$true] %s1199
          %1202 = dma.vmem_to_hbm [thread:$0]  %s1200, 256, %s1197, %s1185
        $region60: #{tpu_custom_call.1} parent=39 // pred_fallthru
          _
      $region40: #{tpu_custom_call.1} parent=5 // pred_fallthru
        _
      %p1203 = scmp.le.s32.totalorder 2, %s19
      // Predicated region
      $region61: #{tpu_custom_call.1} parent=5 // pred_check
        %p1204 = pneg %p1203
      $region62: #{tpu_custom_call.1} parent=5 // pred_check_branch
        %1206 = sbr.rel (%p1204) target = $region64
      $region63: #{tpu_custom_call.1} parent=5 // pred_region
        %s1207 = ssub.s32 %s19, 2
        // Predicated region
        $region65: #{tpu_custom_call.1} parent=63 // pred_check
          %p1208 = pneg %p158
        $region66: #{tpu_custom_call.1} parent=63 // pred_check_branch
          %1210 = sbr.rel (%p1208) target = $region68
        $region67: #{tpu_custom_call.1} parent=63 // pred_region
          %s1211 = sand.u32 %s143, 1
          %s1212 = scalar_lea.sflag [#allocation4], %s1211
          %s1213 = sand.u32 %s143, 1
          %s1214 = smul.addr %s1213, 16
          %s1215 = scalar_lea.vmem [#allocation10], %s1214
          %1216 = dma.done %s1212, 256
        $region68: #{tpu_custom_call.1} parent=63 // pred_fallthru
          _
      $region64: #{tpu_custom_call.1} parent=5 // pred_fallthru
        _
    $region6: #{tpu_custom_call.1} parent=1 // loop_footer
      %s23 = sadd.s32 1, %s19
    $region7: #{tpu_custom_call.1} parent=1 // loop_footer_branch
      %18 = sbr.rel target = $region3
    $region8: #{tpu_custom_call.1} parent=1 // loop_exit
      _
    %1217 = vsyncpa [#allocation3], 1
    %s1218 = scalar_lea.sflag [#allocation3], 1
    %1219 = vsyncpa %s1218, 1
    %1220 = vsyncpa [#allocation6], 1
    %1221 = vsyncpa [#allocation9], 1
    %1222 = vsyncpa [#allocation4], 1
    %s1223 = scalar_lea.sflag [#allocation4], 1
    %1224 = vsyncpa %s1223, 1

</llo_original>
